<compile_context>
chip_gen: v6e
topology: v6e:2x2x1
jax: 0.10.0
libtpu: 0.0.40
codegen_flags: <defaults>
</compile_context>

<pallas_src>
import jax
import jax.numpy as jnp
from jax.experimental import pallas as pl
from jax.experimental.pallas import tpu as pltpu


# ----------------------------- Pallas kernel ------------------------------- #

def _entity_head_kernel(x_ref, w_ref, b_ref, o_ref):
    """One (tm, tn) output tile: full-K matmul + bias, bf16 store."""
    acc = jnp.dot(
        x_ref[...].astype(jnp.bfloat16),          # in-kernel cast (VPU, hidden)
        w_ref[...],                               # resident bf16 weight block
        preferred_element_type=jnp.float32,
    )
    o_ref[...] = (acc + b_ref[...]).astype(o_ref.dtype)


# ------------------------------ helpers ------------------------------------ #

def _round_up(a, b):
    return (a + b - 1) // b * b


_VMEM_TILE_BUDGET = 40 * 1024 * 1024      # keep tiles under this (v7x headroom)
_VMEM_LIMIT_BYTES = 48 * 1024 * 1024      # scoped VMEM limit (safe on v5e/v6e/v7x)
_TINY_FALLBACK = 1 << 21                  # M*H*Np below this -> plain jnp.dot


def prepare_entity_head_params(weight, bias):
    """Hoisted once-per-model prep: weight.T, pad N to 128 lanes, cast bf16."""
    N, H = weight.shape
    Np = _round_up(N, 128)
    w_p = jnp.zeros((H, Np), jnp.bfloat16).at[:, :N].set(weight.T.astype(jnp.bfloat16))
    b_p = jnp.zeros((1, Np), jnp.float32).at[0, :N].set(bias.astype(jnp.float32))
    return {"w": w_p, "b": b_p, "out_features": N}


def entity_head_apply(inputs, prepared, *, tm=512, force_pallas=False):
    """y = inputs @ weight.T + bias   (torch nn.Linear semantics), f32 output."""
    w_p, b_p, N = prepared["w"], prepared["b"], prepared["out_features"]
    orig_shape = inputs.shape
    H = orig_shape[-1]
    Np = w_p.shape[1]
    x2d = inputs.reshape(-1, H)
    M = x2d.shape[0]

    # Tiny problems: pallas_call fixed overhead dwarfs the work -> fused XLA dot.
    if not force_pallas and M * H * Np < _TINY_FALLBACK:
        out = jnp.dot(
            x2d.astype(jnp.bfloat16), w_p, preferred_element_type=jnp.float32
        ) + b_p
        return out[:, :N].astype(jnp.float32).reshape(*orig_shape[:-1], N)

    # ---- N tile: lane-dense multiple of 128 (entity heads: Np == tn == 128).
    if Np <= 512:
        tn_ = Np
    elif Np % 512 == 0:
        tn_ = 512
    else:
        tn_ = 128

    # ---- M tile: biggest block that fits the VMEM budget; >= 2 tiles so both
    #      v7x TensorCores get work when M allows it.
    x_item = x2d.dtype.itemsize
    m_pad8 = _round_up(M, 8)
    tm_ = min(tm, m_pad8)
    if m_pad8 // tm_ < 2 and m_pad8 >= 16:
        tm_ = _round_up((m_pad8 + 1) // 2, 8)

    def _vmem_bytes(t):
        return (2 * t * H * x_item        # double-buffered x blocks
                + 2 * H * tn_ * 2         # bf16 weight block
                + 2 * t * tn_ * 2         # bf16 output blocks
                + 2 * tn_ * 4)            # bias block

    while tm_ > 8 and _vmem_bytes(tm_) > _VMEM_TILE_BUDGET:
        tm_ = _round_up(tm_ // 2, 8)

    Mp = _round_up(M, tm_)
    # Only materialize a padded copy of x when M doesn't tile evenly.  K stays
    # full-width inside the block, so no K padding pass over x is ever needed.
    x_in = x2d if Mp == M else jnp.zeros((Mp, H), x2d.dtype).at[:M].set(x2d)

    grid = (Mp // tm_, Np // tn_)

    out = pl.pallas_call(
        _entity_head_kernel,
        out_shape=jax.ShapeDtypeStruct((Mp, Np), jnp.bfloat16),
        grid_spec=pltpu.PrefetchScalarGridSpec(
            num_scalar_prefetch=0,
            grid=grid,
            in_specs=[
                pl.BlockSpec((tm_, H), lambda i, j: (i, 0)),   # x: full-K row block
                pl.BlockSpec((H, tn_), lambda i, j: (0, j)),   # weight: VMEM-resident
                pl.BlockSpec((1, tn_), lambda i, j: (0, j)),   # bias
            ],
            out_specs=pl.BlockSpec((tm_, tn_), lambda i, j: (i, j)),
        ),
        compiler_params=pltpu.CompilerParams(
            dimension_semantics=("parallel", "parallel"),
            vmem_limit_bytes=_VMEM_LIMIT_BYTES,
        ),
        cost_estimate=pl.CostEstimate(
            flops=2 * Mp * Np * H,
            transcendentals=0,
            bytes_accessed=Mp * H * x_item + H * Np * 2 + Mp * Np * 2 + Np * 4,
        ),
    )(x_in, w_p, b_p)

    return out[:M, :N].astype(jnp.float32).reshape(*orig_shape[:-1], N)


def entity_head(inputs, weight, bias, **kwargs):
    """Convenience one-shot API (prep not hoisted; prefer prepare_* + apply)."""
    return entity_head_apply(inputs, prepare_entity_head_params(weight, bias), **kwargs)


# ------------------------------- params ------------------------------------ #

def init_entity_head_params(key, hidden_size, output_size):
    k_w, k_b = jax.random.split(key)
    weight = jax.random.normal(k_w, (output_size, hidden_size), jnp.float32) * 0.02
    bias = jax.random.normal(k_b, (output_size,), jnp.float32) * 0.02
    return {"weight": weight, "bias": bias}


# --------------------------------- main ------------------------------------ #

if __name__ == "__main__":
    hidden_size = 32
    output_size = 16
    B, S = 2, 8

    key = jax.random.PRNGKey(0)
    k_param, k_x1, k_x2 = jax.random.split(key, 3)

    def reference(x, weight, bias):
        H = x.shape[-1]
        y = jnp.dot(
            x.reshape(-1, H).astype(jnp.bfloat16),
            weight.T.astype(jnp.bfloat16),
            preferred_element_type=jnp.float32,
        ) + bias
        return y.reshape(*x.shape[:-1], weight.shape[0])

    # --- Case 1: module's demo shape, forced through the Pallas kernel. ---
    params = init_entity_head_params(k_param, hidden_size, output_size)
    prepared = prepare_entity_head_params(params["weight"], params["bias"])
    x1 = jax.random.normal(k_x1, (B, S, hidden_size), jnp.float32)

    out1 = jax.block_until_ready(entity_head_apply(x1, prepared, force_pallas=True))
    assert out1.shape == (B, S, output_size), out1.shape
    ref1 = reference(x1, params["weight"], params["bias"])
    assert jnp.all(jnp.isfinite(out1))
    assert jnp.allclose(out1, ref1, rtol=2e-2, atol=2e-2), float(
        jnp.max(jnp.abs(out1 - ref1)))

    # --- Case 1b: auto path (tiny problem -> plain jnp.dot fallback). ---
    out1b = jax.block_until_ready(entity_head_apply(x1, prepared))
    assert jnp.allclose(out1b, ref1, rtol=2e-2, atol=2e-2)

    # --- Case 2: lane-aligned hidden size (H % 128 == 0) -> zero-copy x path. ---
    hidden2 = 128
    params2 = init_entity_head_params(k_param, hidden2, output_size)
    prepared2 = prepare_entity_head_params(params2["weight"], params2["bias"])
    x2 = jax.random.normal(k_x2, (4, 8, hidden2), jnp.float32)

    out2 = jax.block_until_ready(entity_head_apply(x2, prepared2, force_pallas=True))
    assert out2.shape == (4, 8, output_size), out2.shape
    ref2 = reference(x2, params2["weight"], params2["bias"])
    assert jnp.allclose(out2, ref2, rtol=2e-2, atol=2e-2), float(
        jnp.max(jnp.abs(out2 - ref2)))

    print("KERNEL_OK")
</pallas_src>

<mosaic_0001>
module attributes {stable_mosaic.version = 11 : i64} {
  func.func @_entity_head_kernel(%arg0: i32, %arg1: i32, %arg2: memref<8x32xf32, #tpu.memory_space<vmem>>, %arg3: memref<32x128xbf16, #tpu.memory_space<vmem>>, %arg4: memref<1x128xf32, #tpu.memory_space<vmem>>, %arg5: memref<8x128xbf16, #tpu.memory_space<vmem>>) attributes {dimension_semantics = [#tpu.dimension_semantics<parallel>, #tpu.dimension_semantics<parallel>], iteration_bounds = array<i64: 2, 1>, scalar_prefetch = 0 : i64, scratch_operands = 0 : i64, tpu.core_type = #tpu.core_type<tc>, window_params = [{transform_indices = @transform_0, window_bounds = array<i64: 8, 32>}, {transform_indices = @transform_1, window_bounds = array<i64: 32, 128>}, {transform_indices = @transform_2, window_bounds = array<i64: 1, 128>}, {transform_indices = @transform_3, window_bounds = array<i64: 8, 128>}]} {
    %c0 = arith.constant 0 : index
    %c0_0 = arith.constant 0 : index
    %0 = vector.load %arg2[%c0, %c0_0] : memref<8x32xf32, #tpu.memory_space<vmem>>, vector<8x32xf32>
    %1 = arith.truncf %0 : vector<8x32xf32> to vector<8x32xbf16>
    %c0_1 = arith.constant 0 : index
    %c0_2 = arith.constant 0 : index
    %2 = vector.load %arg3[%c0_1, %c0_2] : memref<32x128xbf16, #tpu.memory_space<vmem>>, vector<32x128xbf16>
    %cst = arith.constant dense<0.000000e+00> : vector<8x128xf32>
    %3 = tpu.matmul %1, %2, %cst {dimension_numbers = #tpu.dot_dimension_numbers<[1], [0], [0], [1], [0, 0, 1, 1], [], []>} : vector<8x32xbf16>, vector<32x128xbf16>, vector<8x128xf32> -> vector<8x128xf32>
    %c0_3 = arith.constant 0 : index
    %c0_4 = arith.constant 0 : index
    %4 = vector.load %arg4[%c0_3, %c0_4] : memref<1x128xf32, #tpu.memory_space<vmem>>, vector<1x128xf32>
    %5 = vector.broadcast %4 : vector<1x128xf32> to vector<8x128xf32>
    %6 = arith.addf %3, %5 : vector<8x128xf32>
    %7 = arith.truncf %6 : vector<8x128xf32> to vector<8x128xbf16>
    %c0_5 = arith.constant 0 : index
    %c0_6 = arith.constant 0 : index
    %8 = vector.load %arg5[%c0_5, %c0_6] : memref<8x128xbf16, #tpu.memory_space<vmem>>, vector<8x128xbf16>
    tpu.vector_store %arg5[%c0_5, %c0_6], %7 {strides = array<i32>} : memref<8x128xbf16, #tpu.memory_space<vmem>>, vector<8x128xbf16>,
    return
  }
  func.func @transform_0(%arg0: i32, %arg1: i32) -> (i32, i32) {
    %c0_i32 = arith.constant 0 : i32
    %c0_i32_0 = arith.constant 0 : i32
    return %arg0, %c0_i32 : i32, i32
  }
  func.func @transform_1(%arg0: i32, %arg1: i32) -> (i32, i32) {
    %c0_i32 = arith.constant 0 : i32
    %c0_i32_0 = arith.constant 0 : i32
    return %c0_i32, %arg1 : i32, i32
  }
  func.func @transform_2(%arg0: i32, %arg1: i32) -> (i32, i32) {
    %c0_i32 = arith.constant 0 : i32
    %c0_i32_0 = arith.constant 0 : i32
    return %c0_i32, %arg1 : i32, i32
  }
  func.func @transform_3(%arg0: i32, %arg1: i32) -> (i32, i32) {
    %c0_i32 = arith.constant 0 : i32
    return %arg0, %arg1 : i32, i32
  }
}

</mosaic_0001>

<llo_original>
// kernel: tpu_custom_call.1
$region0: #{tpu_custom_call.1}
  #allocation0 [shape = 'u32[]', space=smem, size = 0x4, offset = 0x4, fixed_abs, tag = 'smem constant byte address 0x4 - core index']
  #allocation1 [shape = 'u32[144,128]{1,0:T(1,128)}', space=vmem, size = 0x12000, scoped, tag = 'internal scratch']
  %s0 = inlined_call_operand.hbm [shape: f32[16,32], index: 0, kind: input, shape index: {}]
  %s1 = inlined_call_operand.hbm [shape: bf16[32,128], index: 1, kind: input, shape index: {}]
  %s2 = inlined_call_operand.vmem [shape: f32[1,128], index: 2, kind: input, shape index: {}]
  %s3 = inlined_call_operand.hbm [shape: bf16[16,128], index: 3, kind: output, shape index: {}]
  %s4 = sld [smem:[#allocation0]]
  $region53: #{tpu_custom_call.1} parent=0
    _
  %s6 = ssub.s32 1, %s4
  %s7 = scalar_select 0, %s6, %s4
  $region1: #{tpu_custom_call.1} parent=0
    #allocation2 [shape = 'u8[8192]{0}', space=vmem, size = 0x2000, scoped, tag = 'input window, operand 0']
    #allocation3 [shape = 's32[2]{0}', space=sflag, size = 0x8, scoped, tag = 'scoped memory for tpu_custom_call.1']
    #allocation4 [shape = 's32[2]{0}', space=sflag, size = 0x8, scoped, tag = 'scoped memory for tpu_custom_call.1']
    #allocation5 [shape = 'u8[8192]{0}', space=vmem, size = 0x2000, scoped, tag = 'input window, operand 1, single buffered']
    #allocation6 [shape = 's32[1]{0}', space=sflag, size = 0x4, scoped, tag = 'scoped memory for tpu_custom_call.1']
    #allocation7 [shape = 'u8[4096]{0}', space=vmem, size = 0x1000, scoped, tag = 'output window, operand 0']
    %8 = vsyncpa [#allocation3], 0
    %s9 = scalar_lea.sflag [#allocation3], 1
    %10 = vsyncpa %s9, 0
    %11 = vsyncpa [#allocation6], 0
    %12 = vsyncpa [#allocation4], 0
    %s13 = scalar_lea.sflag [#allocation4], 1
    %14 = vsyncpa %s13, 0
    loop: start=0, step=1, limit=4
    $region2: #{tpu_custom_call.1} parent=1 // loop_pre_header
      _
    $region3: #{tpu_custom_call.1} parent=1 // loop_header
      %s16 = sphi 0, %s20
      %p17 = scmp.ge.s32.totalorder %s16, 4
      %s23 = sphi 0, %s35
      %s24 = sphi 0, %s31
      %s25 = sphi 0, %s23
      %s26 = sphi 0, %s24
      %s27 = sphi 0, %s25
      %s28 = sphi 0, %s26
      %s38 = sphi 0, %s40
      %s41 = sphi 0, %s38
      %s42 = sphi 0, %s41
      %s58 = sphi 0, %s42
      %s64 = sphi 0, %s66
      %s67 = sphi 0, %s64
      %s68 = sphi 0, %s67
      %s84 = sphi 0, %s68
      %s90 = sphi 0, %s92
      %s93 = sphi 0, %s90
      %s94 = sphi 0, %s93
      %s110 = sphi 0, %s94
      %s118 = sphi 0, %s120
      %s121 = sphi 0, %s118
      %s122 = sphi 0, %s121
      %s138 = sphi 0, %s122
    $region4: #{tpu_custom_call.1} parent=1 // loop_header_branch
      %19 = sbr.rel (%p17) target = $region8
    $region5: #{tpu_custom_call.1} parent=1 // loop_body
      %s21 = ssub.s32 %s16, 1
      %s22 = ssub.s32 %s16, 2
      %s29 = sadd.s32 1, %s24
      %p30 = scmp.ge.s32.totalorder %s29, 1
      %s31 = scalar_select %p30, 0, %s29
      %s32 = sadd.s32 1, %s23
      %s33 = scalar_select %p30, %s32, %s23
      %p34 = scmp.ge.s32.totalorder %s33, 2
      %s35 = scalar_select %p34, 0, %s33
      %s36 = ssub.s32 %s23, %s35
      %p37 = scmp.eq.s32.totalorder %s36, 0
      %s39 = sadd.s32 %s38, 1
      %s40 = scalar_select %p37, %s38, %s39
      %p43 = pneg %p37
      %p44 = scmp.eq.s32.totalorder %s16, 1
      %p45 = por %p43, %p44
      %p46 = scmp.ne.s32.totalorder %s38, %s41
      %p47 = scmp.eq.s32.totalorder %s16, 0
      %p48 = por %p46, %p47
      %p49 = scmp.ne.s32.totalorder %s38, %s41
      %p50 = scmp.eq.s32.totalorder %s21, 1
      %p51 = por %p49, %p50
      %p52 = scmp.ne.s32.totalorder %s41, %s42
      %p53 = scmp.eq.s32.totalorder %s21, 0
      %p54 = por %p52, %p53
      %p55 = scmp.ne.s32.totalorder %s41, %s42
      %p56 = scmp.eq.s32.totalorder %s22, 1
      %p57 = por %p55, %p56
      %p59 = scmp.ne.s32.totalorder %s42, %s58
      %p60 = scmp.eq.s32.totalorder %s22, 0
      %p61 = por %p59, %p60
      %s62 = ssub.s32 %s24, %s31
      %p63 = scmp.eq.s32.totalorder %s62, 0
      %s65 = sadd.s32 %s64, 1
      %s66 = scalar_select %p63, %s64, %s65
      %p69 = pneg %p63
      %p70 = scmp.eq.s32.totalorder %s16, 1
      %p71 = por %p69, %p70
      %p72 = scmp.ne.s32.totalorder %s64, %s67
      %p73 = scmp.eq.s32.totalorder %s16, 0
      %p74 = por %p72, %p73
      %p75 = scmp.ne.s32.totalorder %s64, %s67
      %p76 = scmp.eq.s32.totalorder %s21, 1
      %p77 = por %p75, %p76
      %p78 = scmp.ne.s32.totalorder %s67, %s68
      %p79 = scmp.eq.s32.totalorder %s21, 0
      %p80 = por %p78, %p79
      %p81 = scmp.ne.s32.totalorder %s67, %s68
      %p82 = scmp.eq.s32.totalorder %s22, 1
      %p83 = por %p81, %p82
      %p85 = scmp.ne.s32.totalorder %s68, %s84
      %p86 = scmp.eq.s32.totalorder %s22, 0
      %p87 = por %p85, %p86
      %s88 = ssub.s32 %s24, %s31
      %p89 = scmp.eq.s32.totalorder %s88, 0
      %s91 = sadd.s32 %s90, 1
      %s92 = scalar_select %p89, %s90, %s91
      %p95 = pneg %p89
      %p96 = scmp.eq.s32.totalorder %s16, 1
      %p97 = por %p95, %p96
      %p98 = scmp.ne.s32.totalorder %s90, %s93
      %p99 = scmp.eq.s32.totalorder %s16, 0
      %p100 = por %p98, %p99
      %p101 = scmp.ne.s32.totalorder %s90, %s93
      %p102 = scmp.eq.s32.totalorder %s21, 1
      %p103 = por %p101, %p102
      %p104 = scmp.ne.s32.totalorder %s93, %s94
      %p105 = scmp.eq.s32.totalorder %s21, 0
      %p106 = por %p104, %p105
      %p107 = scmp.ne.s32.totalorder %s93, %s94
      %p108 = scmp.eq.s32.totalorder %s22, 1
      %p109 = por %p107, %p108
      %p111 = scmp.ne.s32.totalorder %s94, %s110
      %p112 = scmp.eq.s32.totalorder %s22, 0
      %p113 = por %p111, %p112
      %s114 = ssub.s32 %s23, %s35
      %s115 = ssub.s32 %s24, %s31
      %s116 = sor.u32 %s114, %s115
      %p117 = scmp.eq.s32.totalorder %s116, 0
      %s119 = sadd.s32 %s118, 1
      %s120 = scalar_select %p117, %s118, %s119
      %p123 = pneg %p117
      %p124 = scmp.eq.s32.totalorder %s16, 1
      %p125 = por %p123, %p124
      %p126 = scmp.ne.s32.totalorder %s118, %s121
      %p127 = scmp.eq.s32.totalorder %s16, 0
      %p128 = por %p126, %p127
      %p129 = scmp.ne.s32.totalorder %s118, %s121
      %p130 = scmp.eq.s32.totalorder %s21, 1
      %p131 = por %p129, %p130
      %p132 = scmp.ne.s32.totalorder %s121, %s122
      %p133 = scmp.eq.s32.totalorder %s21, 0
      %p134 = por %p132, %p133
      %p135 = scmp.ne.s32.totalorder %s121, %s122
      %p136 = scmp.eq.s32.totalorder %s22, 1
      %p137 = por %p135, %p136
      %p139 = scmp.ne.s32.totalorder %s122, %s138
      %p140 = scmp.eq.s32.totalorder %s22, 0
      %p141 = por %p139, %p140
      %p142 = scmp.le.s32.totalorder 1, %s16
      %p143 = scmp.lt.s32.totalorder %s16, 3
      %p144 = pnand %p142, %p143
      %p145 = pneg %p144
      // Predicated region
      $region9: #{tpu_custom_call.1} parent=5 // pred_check
        _
      $region10: #{tpu_custom_call.1} parent=5 // pred_check_branch
        %147 = sbr.rel (%p144) target = $region12
      $region11: #{tpu_custom_call.1} parent=5 // pred_region
        %s148 = ssub.s32 %s16, 1
        // Predicated region
        $region13: #{tpu_custom_call.1} parent=11 // pred_check
          %p149 = pneg %p80
        $region14: #{tpu_custom_call.1} parent=11 // pred_check_branch
          %151 = sbr.rel (%p149) target = $region16
        $region15: #{tpu_custom_call.1} parent=11 // pred_region
          %s153 = ssub.s32 256, 256
          %154 = vsyncadd [#allocation6], %s153
          %s155 = smul.addr %s26, 64
          %s156 = scalar_lea.hbm %s1, %s155
          %s157 = sshll.u32 [#allocation5], 4
          %s158 = int_to_ptr.vmem [resolvable:$true] %s157
          %163 = dma.hbm_to_vmem [thread:$0]  %s156, 256, %s158, [#allocation6], 64, 64, 4
        $region16: #{tpu_custom_call.1} parent=11 // pred_fallthru
          _
        // Predicated region
        $region17: #{tpu_custom_call.1} parent=11 // pred_check
          %p164 = pneg %p106
        $region18: #{tpu_custom_call.1} parent=11 // pred_check_branch
          %166 = sbr.rel (%p164) target = $region20
        $region19: #{tpu_custom_call.1} parent=11 // pred_region
          %p167 = scmp.lt.s32.totalorder %s26, 0
          %s168 = scalar_select %p167, %s26, 0
          %s169 = scalar_lea.vmem %s2, %s168
        $region20: #{tpu_custom_call.1} parent=11 // pred_fallthru
          _
      $region12: #{tpu_custom_call.1} parent=5 // pred_fallthru
        _
      %p170 = scmp.lt.s32.totalorder %s16, 2
      // Predicated region
      $region21: #{tpu_custom_call.1} parent=5 // pred_check
        %p171 = pneg %p170
      $region22: #{tpu_custom_call.1} parent=5 // pred_check_branch
        %173 = sbr.rel (%p171) target = $region24
      $region23: #{tpu_custom_call.1} parent=5 // pred_region
        // Predicated region
        $region25: #{tpu_custom_call.1} parent=23 // pred_check
          %p174 = pneg %p48
        $region26: #{tpu_custom_call.1} parent=23 // pred_check_branch
          %176 = sbr.rel (%p174) target = $region28
        $region27: #{tpu_custom_call.1} parent=23 // pred_region
          %s177 = sand.u32 %s38, 1
          %s178 = scalar_lea.sflag [#allocation3], %s177
          %s179 = sand.u32 %s38, 1
          %s180 = smul.addr %s179, 8
          %s181 = scalar_lea.vmem [#allocation2], %s180
          %s183 = ssub.s32 128, 128
          %184 = vsyncadd %s178, %s183
          %s185 = smul.addr %s23, 128
          %s186 = scalar_lea.hbm %s0, %s185
          %s188 = sshll.u32 %s181, 4
          %s189 = int_to_ptr.vmem [resolvable:$true] %s188
          %191 = dma.hbm_to_vmem [thread:$0]  %s186, 128, %s189, %s178
        $region28: #{tpu_custom_call.1} parent=23 // pred_fallthru
          _
      $region24: #{tpu_custom_call.1} parent=5 // pred_fallthru
        _
      %p192 = scmp.le.s32.totalorder 1, %s16
      %p193 = scmp.lt.s32.totalorder %s16, 3
      %p194 = pnand %p192, %p193
      %p195 = pneg %p194
      // Predicated region
      $region29: #{tpu_custom_call.1} parent=5 // pred_check
        _
      $region30: #{tpu_custom_call.1} parent=5 // pred_check_branch
        %197 = sbr.rel (%p194) target = $region32
      $region31: #{tpu_custom_call.1} parent=5 // pred_region
        %s198 = ssub.s32 %s16, 1
        %s199 = sand.u32 %s41, 1
        %s200 = scalar_lea.sflag [#allocation3], %s199
        %s201 = sand.u32 %s41, 1
        %s202 = smul.addr %s201, 8
        %s203 = scalar_lea.vmem [#allocation2], %s202
        // Predicated region
        $region33: #{tpu_custom_call.1} parent=31 // pred_check
          %p204 = pneg %p54
        $region34: #{tpu_custom_call.1} parent=31 // pred_check_branch
          %206 = sbr.rel (%p204) target = $region36
        $region35: #{tpu_custom_call.1} parent=31 // pred_region
          %207 = dma.done %s200, 128
        $region36: #{tpu_custom_call.1} parent=31 // pred_fallthru
          _
        // Predicated region
        $region37: #{tpu_custom_call.1} parent=31 // pred_check
          %p208 = pneg %p80
        $region38: #{tpu_custom_call.1} parent=31 // pred_check_branch
          %210 = sbr.rel (%p208) target = $region40
        $region39: #{tpu_custom_call.1} parent=31 // pred_region
          %211 = dma.done [#allocation6], 256
        $region40: #{tpu_custom_call.1} parent=31 // pred_fallthru
          _
        %s212 = sand.u32 %s41, 1
        %s213 = scalar_lea.sflag [#allocation3], %s212
        %s214 = sand.u32 %s41, 1
        %s215 = smul.addr %s214, 8
        %s216 = scalar_lea.vmem [#allocation2], %s215
        %p217 = pneg %p54
        %p218 = pneg %p51
        %p219 = pneg %p80
        %p220 = pneg %p77
        %p221 = scmp.lt.s32.totalorder %s26, 0
        %s222 = scalar_select %p221, %s26, 0
        %s223 = scalar_lea.vmem %s2, %s222
        %p224 = pneg %p106
        %p225 = pneg %p103
        %p226 = pneg %p134
        %p227 = pneg %p131
        %s228 = sand.u32 %s121, 1
        %s229 = scalar_lea.sflag [#allocation4], %s228
        %s230 = sand.u32 %s121, 1
        %s231 = smul.addr %s230, 4
        %s232 = scalar_lea.vmem [#allocation7], %s231
        %p233 = scmp.lt.s32.totalorder %s26, 0
        %s234 = scalar_select %p233, %s26, 0
        %s235 = scalar_lea.vmem %s2, %s234
        %v237 = vld [vmem:[%s203] sm:$0xff]
        %v238 = vpack.c.bf16 %v237, %v237
        %v239 = vld [vmem:[#allocation5] sm:$0xf]
        %v240 = vld [vmem:[#allocation5 + $0x4] sm:$0xf]
        %v241 = vld [vmem:[#allocation5 + $0x8] sm:$0xf]
        %v242 = vld [vmem:[#allocation5 + $0xc] sm:$0xf]
        %v243 = vld [vmem:[%s235] sm:$0x1]
        %v245 = vlaneseq
        %v246 = vshrl.u32 %v245, 7
        %v247 = vsub.s32 0, %v246
        %v248 = vrot.slane %v243, %v247
        %v254 = vunpack.c.l.b16 %v239
        %v255 = vunpack.c.l.b16 %v240
        %v256 = vunpack.c.l.b16 %v241
        %v257 = vunpack.c.l.b16 %v242
        %v258 = vpack.c.b16 %v255, %v254
        %v259 = vpack.c.b16 %v257, %v256
        %vm262 = vcmask 261120
        %v264 = vsel %vm262, %v238, 0
        %266 = vmatprep.subr.bf16.mxu0 0
        %267 = vmatpush1.bf16.msra.mxu0 0
        %268 = vmatprep.subr.bf16.mxu0 0
        %269 = vmatpush1.bf16.msra.mxu0 0
        %270 = vmatprep.subr.bf16.mxu0 0
        %271 = vmatpush1.bf16.msra.mxu0 0
        %272 = vmatprep.subr.bf16.mxu0 0
        %273 = vmatpush1.bf16.msra.mxu0 0
        %274 = vmatprep.subr.bf16.mxu0 0
        %275 = vmatpush1.bf16.msra.mxu0 0
        %276 = vmatprep.subr.bf16.mxu0 0
        %277 = vmatpush1.bf16.msra.mxu0 0
        %278 = vmatprep.subr.bf16.mxu0 0
        %279 = vmatpush1.bf16.msra.mxu0 %v259
        %280 = vmatprep.subr.bf16.mxu0 0
        %281 = vmatpush1.bf16.msra.mxu0 %v258
        %282 = vmatprep.subr.bf16.mxu0 0
        %283 = vmatpush2.bf16.msra.mxu0 0
        %284 = vmatprep.subr.bf16.mxu0 0
        %285 = vmatpush2.bf16.msra.mxu0 0
        %286 = vmatprep.subr.bf16.mxu0 0
        %287 = vmatpush2.bf16.msra.mxu0 0
        %288 = vmatprep.subr.bf16.mxu0 0
        %289 = vmatpush2.bf16.msra.mxu0 0
        %290 = vmatprep.subr.bf16.mxu0 0
        %291 = vmatpush2.bf16.msra.mxu0 0
        %292 = vmatprep.subr.bf16.mxu0 0
        %293 = vmatpush2.bf16.msra.mxu0 0
        %294 = vmatprep.subr.bf16.mxu0 0
        %295 = vmatpush2.bf16.msra.mxu0 0
        %296 = vmatprep.subr.bf16.mxu0 0
        %297 = vmatpush2.bf16.msra.mxu0 0
        %298 = vmatprep.mubr.bf16.mxu0 0
        %299 = vmatmul.mubr.bf16.gmra.mxu0 %v264
        %v300 = vpop.f32.mrf.mxu0
        %v301 = vadd.f32 %v248, %v300
        %v302 = vpop.f32.mrf.mxu0
        %v303 = vpop.f32.mrf.mxu0
        %v304 = vpop.f32.mrf.mxu0
        %305 = vdwg.mxu0
        %v306 = vpack.c.bf16 %v301, %v301
        %307 = vst [vmem:[%s232] sm:$0xf] %v306
        %s308 = sand.u32 %s121, 1
        %s309 = scalar_lea.sflag [#allocation4], %s308
        %s310 = sand.u32 %s121, 1
        %s311 = smul.addr %s310, 4
        %s312 = scalar_lea.vmem [#allocation7], %s311
        // Predicated region
        $region41: #{tpu_custom_call.1} parent=31 // pred_check
          %p313 = pneg %p131
        $region42: #{tpu_custom_call.1} parent=31 // pred_check_branch
          %315 = sbr.rel (%p313) target = $region44
        $region43: #{tpu_custom_call.1} parent=31 // pred_region
          %s317 = ssub.s32 64, 64
          %318 = vsyncadd %s309, %s317
          %s319 = sadd.s32 %s26, %s25
          %s320 = smul.addr %s319, 64
          %s321 = scalar_lea.hbm %s3, %s320
          %s323 = sshll.u32 %s312, 4
          %s324 = int_to_ptr.vmem [resolvable:$true] %s323
          %326 = dma.vmem_to_hbm [thread:$0]  %s324, 64, %s321, %s309
        $region44: #{tpu_custom_call.1} parent=31 // pred_fallthru
          _
      $region32: #{tpu_custom_call.1} parent=5 // pred_fallthru
        _
      %p327 = scmp.le.s32.totalorder 2, %s16
      // Predicated region
      $region45: #{tpu_custom_call.1} parent=5 // pred_check
        %p328 = pneg %p327
      $region46: #{tpu_custom_call.1} parent=5 // pred_check_branch
        %330 = sbr.rel (%p328) target = $region48
      $region47: #{tpu_custom_call.1} parent=5 // pred_region
        %s331 = ssub.s32 %s16, 2
        // Predicated region
        $region49: #{tpu_custom_call.1} parent=47 // pred_check
          %p332 = pneg %p137
        $region50: #{tpu_custom_call.1} parent=47 // pred_check_branch
          %334 = sbr.rel (%p332) target = $region52
        $region51: #{tpu_custom_call.1} parent=47 // pred_region
          %s335 = sand.u32 %s122, 1
          %s336 = scalar_lea.sflag [#allocation4], %s335
          %s337 = sand.u32 %s122, 1
          %s338 = smul.addr %s337, 4
          %s339 = scalar_lea.vmem [#allocation7], %s338
          %340 = dma.done %s336, 64
        $region52: #{tpu_custom_call.1} parent=47 // pred_fallthru
          _
      $region48: #{tpu_custom_call.1} parent=5 // pred_fallthru
        _
    $region6: #{tpu_custom_call.1} parent=1 // loop_footer
      %s20 = sadd.s32 1, %s16
    $region7: #{tpu_custom_call.1} parent=1 // loop_footer_branch
      %15 = sbr.rel target = $region3
    $region8: #{tpu_custom_call.1} parent=1 // loop_exit
      _
    %341 = vsyncpa [#allocation3], 1
    %s342 = scalar_lea.sflag [#allocation3], 1
    %343 = vsyncpa %s342, 1
    %344 = vsyncpa [#allocation6], 1
    %345 = vsyncpa [#allocation4], 1
    %s346 = scalar_lea.sflag [#allocation4], 1
    %347 = vsyncpa %s346, 1

</llo_original>
